<compile_context>
chip_gen: v7x
topology: tpu7x:2x2x1
jax: 0.10.0
libtpu: 0.0.40
codegen_flags: <defaults>
</compile_context>

<pallas_src>
import functools

import jax
import jax.numpy as jnp
from jax.experimental import pallas as pl
from jax.experimental.pallas import tpu as pltpu


def _ceil_to(x: int, m: int) -> int:
    return ((x + m - 1) // m) * m


@functools.lru_cache(maxsize=None)
def _pipeline_mode_supported() -> bool:
    """Narrow feature probe: does BlockSpec accept pipeline_mode=pl.Buffered(n)?
    (No pallas_call is ever wrapped in a broad try/except.)"""
    if not hasattr(pl, "Buffered"):
        return False
    try:
        pl.BlockSpec((8, 128), lambda i: (0, 0), pipeline_mode=pl.Buffered(1))
        return True
    except TypeError:
        return False


def _spec(block_shape, index_map, *, buffers=None):
    if buffers is not None and _pipeline_mode_supported():
        return pl.BlockSpec(block_shape, index_map, pipeline_mode=pl.Buffered(buffers))
    return pl.BlockSpec(block_shape, index_map)


def _vmem_capacity_bytes() -> int:
    # Capability query only (safe fallback value); never used to mask kernel errors.
    try:
        return int(pltpu.get_tpu_info().vmem_capacity_bytes)
    except Exception:
        return 64 * 1024 * 1024


def _vmem_limit_bytes(cap: int) -> int:
    # Leave headroom for Mosaic-internal scratch: ~100 MiB on 128-MiB parts
    # (v5e/v6e), ~52 MiB on v7x's 64-MiB per-TC VMEM.
    return max(32 * 1024 * 1024, min(cap - 12 * 1024 * 1024, 100 * 1024 * 1024))


def _auto_tiles(batch: int, vocab: int, cap: int):
    big_vmem = cap >= 96 * 1024 * 1024          # v5e / v6e (128 MiB) vs v7x (64 MiB)
    tm = 512 if big_vmem else 256
    tn = 2048 if big_vmem else 1024
    tk = 2048 if big_vmem else 1024
    bp8 = _ceil_to(batch, 8)
    tm = min(tm, bp8)
    # Keep >= 2 batch tiles for large batches so the 'parallel' batch axis can
    # be sharded across v7x's two TensorCores; tiny problems collapse to 1 step.
    if bp8 >= 256 and bp8 // tm < 2:
        tm = _ceil_to((bp8 + 1) // 2, 8)
    tn = min(tn, _ceil_to(vocab, 128))
    tk = min(tk, _ceil_to(vocab, 128))
    return tm, tn, tk


# ----------------------------- kernels --------------------------------------


def _embedding_kernel(x_ref, w1t_ref, b1_ref, h_ref, acc_ref):
    # h = x @ W1^T + b1, with the vocab-in contraction tiled along grid axis 1.
    k = pl.program_id(1)

    @pl.when(k == 0)
    def _():
        acc_ref[...] = jnp.zeros_like(acc_ref)

    acc_ref[...] += jnp.dot(x_ref[...], w1t_ref[...],
                            preferred_element_type=jnp.float32)

    @pl.when(k == pl.num_programs(1) - 1)
    def _():
        h_ref[...] = (acc_ref[...] + b1_ref[...]).astype(h_ref.dtype)


def _output_kernel(h_ref, w2t_ref, b2_ref, o_ref):
    # out = h @ W2^T + b2 for one (batch-tile, vocab-out-tile); E fits one block.
    out = jnp.dot(h_ref[...], w2t_ref[...], preferred_element_type=jnp.float32)
    o_ref[...] = (out + b2_ref[...]).astype(o_ref.dtype)


# --------------------------- call builders -----------------------------------


def _embedding_call(Bp, Kp, E, tm, tk, h_dtype, vmem_limit):
    flops = 2 * Bp * Kp * E
    bytes_accessed = Bp * Kp * 2 + Kp * E * 2 + E * 4 + Bp * E * 2
    return pl.pallas_call(
        _embedding_kernel,
        out_shape=jax.ShapeDtypeStruct((Bp, E), h_dtype),
        grid_spec=pltpu.PrefetchScalarGridSpec(
            num_scalar_prefetch=0,
            grid=(Bp // tm, Kp // tk),
            in_specs=[
                _spec((tm, tk), lambda i, k: (i, k)),              # x batch/K tile
                _spec((tk, E), lambda i, k: (k, 0)),               # W1^T K tile
                _spec((1, E), lambda i, k: (0, 0), buffers=1),     # b1 (grid constant)
            ],
            out_specs=pl.BlockSpec((tm, E), lambda i, k: (i, 0)),  # held across k
            scratch_shapes=[pltpu.VMEM((tm, E), jnp.float32)],     # f32 accumulator
        ),
        compiler_params=pltpu.CompilerParams(
            dimension_semantics=("parallel", "arbitrary"),
            vmem_limit_bytes=vmem_limit,
        ),
        cost_estimate=pl.CostEstimate(flops=flops, transcendentals=0,
                                      bytes_accessed=bytes_accessed),
    )


def _output_call(Bp, Vp, E, tm, tn, out_dtype, vmem_limit):
    out_bytes = jnp.dtype(out_dtype).itemsize
    flops = 2 * Bp * Vp * E
    bytes_accessed = Bp * E * 2 + Vp * E * 2 + Vp * 4 + Bp * Vp * out_bytes
    return pl.pallas_call(
        _output_kernel,
        out_shape=jax.ShapeDtypeStruct((Bp, Vp), out_dtype),
        grid_spec=pltpu.PrefetchScalarGridSpec(
            num_scalar_prefetch=0,
            grid=(Bp // tm, Vp // tn),
            in_specs=[
                _spec((tm, E), lambda i, j: (i, 0)),               # h batch tile
                _spec((E, tn), lambda i, j: (0, j), buffers=3),    # W2^T vocab tile (streamed)
                _spec((1, tn), lambda i, j: (0, j), buffers=3),    # b2 vocab tile
            ],
            out_specs=pl.BlockSpec((tm, tn), lambda i, j: (i, j)),
        ),
        compiler_params=pltpu.CompilerParams(
            dimension_semantics=("parallel", "parallel"),
            vmem_limit_bytes=vmem_limit,
        ),
        cost_estimate=pl.CostEstimate(flops=flops, transcendentals=0,
                                      bytes_accessed=bytes_accessed),
    )


def _run_layer2(h_pad, w2t, b2r, B, V, Bp, E, tm, tn, out_dtype, vmem_limit):
    Vp = _ceil_to(V, tn)
    if Vp != V:
        w2t = jnp.pad(w2t, ((0, 0), (0, Vp - V)))
        b2r = jnp.pad(b2r, ((0, 0), (0, Vp - V)))
    out = _output_call(Bp, Vp, E, tm, tn, out_dtype, vmem_limit)(h_pad, w2t, b2r)
    return out[:B, :V]


# ------------------------------ wrappers --------------------------------------


def skipgram_forward(x, w1, b1, w2, b2, *, tm=None, tn=None, tk=None,
                     out_dtype=jnp.float32, compute_dtype=jnp.bfloat16):
    """Dense SkipGram forward. x: (B, V); w1: (E, V); b1: (E,); w2: (V, E);
    b2: (V,). Returns (B, V) logits in out_dtype."""
    B, V = x.shape
    E = w1.shape[0]
    assert w1.shape == (E, V) and w2.shape == (V, E)
    assert b1.shape == (E,) and b2.shape == (V,)

    cap = _vmem_capacity_bytes()
    vmem_limit = _vmem_limit_bytes(cap)
    a_tm, a_tn, a_tk = _auto_tiles(B, V, cap)
    tm = a_tm if tm is None else _ceil_to(min(tm, _ceil_to(B, 8)), 8)
    tn = a_tn if tn is None else _ceil_to(min(tn, _ceil_to(V, 128)), 128)
    tk = a_tk if tk is None else _ceil_to(min(tk, _ceil_to(V, 128)), 128)

    Bp = _ceil_to(B, tm)
    Kp = _ceil_to(V, tk)   # layer-1 contraction (vocab-in) padding

    # bf16 MXU operands; f32 biases; zero padding is exact.
    x_c = x.astype(compute_dtype)
    w1t = w1.T.astype(compute_dtype)              # (V, E)
    b1r = b1.reshape(1, E).astype(jnp.float32)
    if Bp != B or Kp != V:
        x_c = jnp.pad(x_c, ((0, Bp - B), (0, Kp - V)))
        w1t = jnp.pad(w1t, ((0, Kp - V), (0, 0)))

    # Layer 1: K-tiled GEMM producing the small (Bp, E) hidden activation.
    # (Padded batch rows hold h = b1; harmless, they are sliced off below.)
    h = _embedding_call(Bp, Kp, E, tm, tk, compute_dtype, vmem_limit)(x_c, w1t, b1r)

    # Layer 2: lane-dense (tm, tn) logit tiles.
    w2t = w2.T.astype(compute_dtype)              # (E, V)
    b2r = b2.reshape(1, V).astype(jnp.float32)
    return _run_layer2(h, w2t, b2r, B, V, Bp, E, tm, tn, out_dtype, vmem_limit)


def skipgram_forward_from_indices(indices, w1, b1, w2, b2, *, tm=None, tn=None,
                                  out_dtype=jnp.float32, compute_dtype=jnp.bfloat16):
    """One-hot fast path: x is the one-hot row of indices[b], so layer 1 is an
    embedding row gather (W1^T[idx] + b1) instead of a B*V*E GEMM / B*V HBM read;
    the layer-2 Pallas kernel is shared with the dense path."""
    B = int(indices.shape[0])
    E, V = w1.shape
    cap = _vmem_capacity_bytes()
    vmem_limit = _vmem_limit_bytes(cap)
    a_tm, a_tn, _ = _auto_tiles(B, V, cap)
    tm = a_tm if tm is None else _ceil_to(min(tm, _ceil_to(B, 8)), 8)
    tn = a_tn if tn is None else _ceil_to(min(tn, _ceil_to(V, 128)), 128)
    Bp = _ceil_to(B, tm)

    # TODO(synk): for very large B, perform this gather inside the layer-2 kernel
    # (scalar-prefetched indices + manual row DMA) so h never round-trips HBM.
    rows = jnp.take(w1.T, indices, axis=0)                         # (B, E) f32
    rows = rows.astype(compute_dtype).astype(jnp.float32)          # same quantization as dense path
    h = (rows + b1.astype(jnp.float32)).astype(compute_dtype)
    if Bp != B:
        h = jnp.pad(h, ((0, Bp - B), (0, 0)))

    w2t = w2.T.astype(compute_dtype)
    b2r = b2.reshape(1, V).astype(jnp.float32)
    return _run_layer2(h, w2t, b2r, B, V, Bp, E, tm, tn, out_dtype, vmem_limit)


# ------------------------------- demo -----------------------------------------


if __name__ == "__main__":
    # Small-but-MXU-friendly shapes consistent with SkipGram(vocab_size, emb_dim).
    batch, vocab_size, emb_dim = 256, 512, 128

    key = jax.random.PRNGKey(0)
    kx, kw1, kb1, kw2, kb2, kidx = jax.random.split(key, 6)

    x = jax.random.normal(kx, (batch, vocab_size), dtype=jnp.float32)
    w1 = jax.random.normal(kw1, (emb_dim, vocab_size), dtype=jnp.float32) * 0.02
    b1 = jax.random.normal(kb1, (emb_dim,), dtype=jnp.float32) * 0.02
    w2 = jax.random.normal(kw2, (vocab_size, emb_dim), dtype=jnp.float32) * 0.02
    b2 = jax.random.normal(kb2, (vocab_size,), dtype=jnp.float32) * 0.02

    # Small explicit tiles so every grid axis has >= 2 steps
    # (layer-1: 2x2 batch/K grid, layer-2: 2x2 batch/vocab-out grid).
    out = skipgram_forward(x, w1, b1, w2, b2, tm=128, tn=256, tk=256)
    out = jax.block_until_ready(out)
    assert out.shape == (batch, vocab_size) and out.dtype == jnp.float32

    f32 = jnp.float32
    # Reference 1: same bf16 quantization the kernels use (tight tolerance).
    xb = x.astype(jnp.bfloat16).astype(f32)
    w1b = w1.astype(jnp.bfloat16).astype(f32)
    w2b = w2.astype(jnp.bfloat16).astype(f32)
    h_ref = (xb @ w1b.T + b1).astype(jnp.bfloat16).astype(f32)
    ref_bf16 = h_ref @ w2b.T + b2
    assert jnp.allclose(out, ref_bf16, atol=2e-3, rtol=2e-3)

    # Reference 2: full-f32 forward (exact PyTorch semantics), loose tolerance
    # bounding the bf16 compute path.
    ref_f32 = (x @ w1.T + b1) @ w2.T + b2
    assert jnp.allclose(out, ref_f32, atol=3e-2, rtol=3e-2)

    # bf16-logit variant (halves the dominant B*V HBM writeback).
    out_bf16 = skipgram_forward(x, w1, b1, w2, b2, tm=128, tn=256, tk=256,
                                out_dtype=jnp.bfloat16)
    out_bf16 = jax.block_until_ready(out_bf16)
    assert out_bf16.dtype == jnp.bfloat16
    assert jnp.allclose(out_bf16.astype(f32), out, atol=5e-3, rtol=2e-2)

    # One-hot fast path must match the dense kernel run on the equivalent
    # one-hot matrix (layer 1 becomes a gather instead of a GEMM).
    idx = jax.random.randint(kidx, (batch,), 0, vocab_size)
    x_onehot = jax.nn.one_hot(idx, vocab_size, dtype=jnp.float32)
    out_oh_dense = skipgram_forward(x_onehot, w1, b1, w2, b2, tm=128, tn=256, tk=256)
    out_oh_idx = skipgram_forward_from_indices(idx, w1, b1, w2, b2, tm=128, tn=256)
    jax.block_until_ready((out_oh_dense, out_oh_idx))
    assert jnp.allclose(out_oh_dense, out_oh_idx, atol=1e-5, rtol=1e-5)

    print("KERNEL_OK")
</pallas_src>

<mosaic_0001>
module attributes {stable_mosaic.version = 11 : i64} {
  func.func @_embedding_kernel(%arg0: i32, %arg1: i32, %arg2: memref<128x256xbf16, #tpu.memory_space<vmem>>, %arg3: memref<256x128xbf16, #tpu.memory_space<vmem>>, %arg4: memref<1x128xf32, #tpu.memory_space<vmem>>, %arg5: memref<128x128xbf16, #tpu.memory_space<vmem>>, %arg6: memref<128x128xf32, #tpu.memory_space<vmem>>) attributes {dimension_semantics = [#tpu.dimension_semantics<parallel>, #tpu.dimension_semantics<arbitrary>], iteration_bounds = array<i64: 2, 2>, scalar_prefetch = 0 : i64, scratch_operands = 1 : i64, tpu.core_type = #tpu.core_type<tc>, window_params = [{transform_indices = @transform_0, window_bounds = array<i64: 128, 256>}, {transform_indices = @transform_1, window_bounds = array<i64: 256, 128>}, {pipeline_mode = #tpu.pipeline_mode<synchronous>, transform_indices = @transform_2, window_bounds = array<i64: 1, 128>}, {transform_indices = @transform_3, window_bounds = array<i64: 128, 128>}]} {
    %c0_i32 = arith.constant 0 : i32
    %0 = arith.cmpi eq, %arg1, %c0_i32 : i32
    %1 = arith.extui %0 : i1 to i32
    %c0_i32_0 = arith.constant 0 : i32
    %2 = arith.cmpi ne, %1, %c0_i32_0 : i32
    scf.if %2 {
      %cst_9 = arith.constant 0.000000e+00 : f32
      %12 = vector.broadcast %cst_9 : f32 to vector<128x128xf32>
      %c0_10 = arith.constant 0 : index
      %c0_11 = arith.constant 0 : index
      %13 = vector.load %arg6[%c0_10, %c0_11] : memref<128x128xf32, #tpu.memory_space<vmem>>, vector<128x128xf32>
      tpu.vector_store %arg6[%c0_10, %c0_11], %12 {strides = array<i32>} : memref<128x128xf32, #tpu.memory_space<vmem>>, vector<128x128xf32>,
    } else {
    }
    %c0 = arith.constant 0 : index
    %c0_1 = arith.constant 0 : index
    %3 = vector.load %arg6[%c0, %c0_1] : memref<128x128xf32, #tpu.memory_space<vmem>>, vector<128x128xf32>
    %c0_2 = arith.constant 0 : index
    %c0_3 = arith.constant 0 : index
    %4 = vector.load %arg2[%c0_2, %c0_3] : memref<128x256xbf16, #tpu.memory_space<vmem>>, vector<128x256xbf16>
    %c0_4 = arith.constant 0 : index
    %c0_5 = arith.constant 0 : index
    %5 = vector.load %arg3[%c0_4, %c0_5] : memref<256x128xbf16, #tpu.memory_space<vmem>>, vector<256x128xbf16>
    %cst = arith.constant dense<0.000000e+00> : vector<128x128xf32>
    %6 = tpu.matmul %4, %5, %cst {dimension_numbers = #tpu.dot_dimension_numbers<[1], [0], [0], [1], [0, 0, 1, 1], [], []>} : vector<128x256xbf16>, vector<256x128xbf16>, vector<128x128xf32> -> vector<128x128xf32>
    %7 = arith.addf %3, %6 : vector<128x128xf32>
    %c0_6 = arith.constant 0 : index
    %c0_7 = arith.constant 0 : index
    %8 = vector.load %arg6[%c0_6, %c0_7] : memref<128x128xf32, #tpu.memory_space<vmem>>, vector<128x128xf32>
    tpu.vector_store %arg6[%c0_6, %c0_7], %7 {strides = array<i32>} : memref<128x128xf32, #tpu.memory_space<vmem>>, vector<128x128xf32>,
    %c1_i32 = arith.constant 1 : i32
    %9 = arith.cmpi eq, %arg1, %c1_i32 : i32
    %10 = arith.extui %9 : i1 to i32
    %c0_i32_8 = arith.constant 0 : i32
    %11 = arith.cmpi ne, %10, %c0_i32_8 : i32
    scf.if %11 {
      %c0_9 = arith.constant 0 : index
      %c0_10 = arith.constant 0 : index
      %12 = vector.load %arg6[%c0_9, %c0_10] : memref<128x128xf32, #tpu.memory_space<vmem>>, vector<128x128xf32>
      %c0_11 = arith.constant 0 : index
      %c0_12 = arith.constant 0 : index
      %13 = vector.load %arg4[%c0_11, %c0_12] : memref<1x128xf32, #tpu.memory_space<vmem>>, vector<1x128xf32>
      %14 = vector.broadcast %13 : vector<1x128xf32> to vector<128x128xf32>
      %15 = arith.addf %12, %14 : vector<128x128xf32>
      %16 = arith.truncf %15 : vector<128x128xf32> to vector<128x128xbf16>
      %c0_13 = arith.constant 0 : index
      %c0_14 = arith.constant 0 : index
      %17 = vector.load %arg5[%c0_13, %c0_14] : memref<128x128xbf16, #tpu.memory_space<vmem>>, vector<128x128xbf16>
      tpu.vector_store %arg5[%c0_13, %c0_14], %16 {strides = array<i32>} : memref<128x128xbf16, #tpu.memory_space<vmem>>, vector<128x128xbf16>,
    } else {
    }
    return
  }
  func.func @transform_0(%arg0: i32, %arg1: i32) -> (i32, i32) {
    %c0_i32 = arith.constant 0 : i32
    return %arg0, %arg1 : i32, i32
  }
  func.func @transform_1(%arg0: i32, %arg1: i32) -> (i32, i32) {
    %c0_i32 = arith.constant 0 : i32
    %c0_i32_0 = arith.constant 0 : i32
    return %arg1, %c0_i32 : i32, i32
  }
  func.func @transform_2(%arg0: i32, %arg1: i32) -> (i32, i32) {
    %c0_i32 = arith.constant 0 : i32
    %c0_i32_0 = arith.constant 0 : i32
    %c0_i32_1 = arith.constant 0 : i32
    return %c0_i32, %c0_i32_0 : i32, i32
  }
  func.func @transform_3(%arg0: i32, %arg1: i32) -> (i32, i32) {
    %c0_i32 = arith.constant 0 : i32
    %c0_i32_0 = arith.constant 0 : i32
    return %arg0, %c0_i32 : i32, i32
  }
}

</mosaic_0001>

<llo_original>
// kernel: tpu_custom_call.1
$region0: #{tpu_custom_call.1}
  #allocation0 [shape = 'u32[]', space=smem, size = 0x4, offset = 0x4, fixed_abs, tag = 'smem constant byte address 0x4 - core index']
  #allocation1 [shape = 'u32[144,128]{1,0:T(1,128)}', space=vmem, size = 0x12000, scoped, tag = 'internal scratch']
  #allocation2 [shape = 'f32[128,128]{1,0:T(8,128)}', space=vmem, size = 0x10000, scoped, tag = 'scratch operand']
  %s0 = inlined_call_operand.hbm [shape: bf16[256,512], index: 0, kind: input, shape index: {}]
  %s1 = inlined_call_operand.hbm [shape: bf16[512,128], index: 1, kind: input, shape index: {}]
  %s2 = inlined_call_operand.vmem [shape: f32[1,128], index: 2, kind: input, shape index: {}]
  %s3 = inlined_call_operand.hbm [shape: bf16[256,128], index: 3, kind: output, shape index: {}]
  %s4 = sld [smem:[#allocation0]]
  $region61: #{tpu_custom_call.1} parent=0
    _
  %s6 = ssub.s32 1, %s4
  %s7 = scalar_select 0, %s6, %s4
  $region1: #{tpu_custom_call.1} parent=0
    #allocation3 [shape = 'u8[131072]{0}', space=vmem, size = 0x20000, scoped, tag = 'input window, operand 0']
    #allocation4 [shape = 's32[2]{0}', space=sflag, size = 0x8, scoped, tag = 'scoped memory for tpu_custom_call.1']
    #allocation5 [shape = 's32[2]{0}', space=sflag, size = 0x8, scoped, tag = 'scoped memory for tpu_custom_call.1']
    #allocation6 [shape = 'u8[131072]{0}', space=vmem, size = 0x20000, scoped, tag = 'input window, operand 1']
    #allocation7 [shape = 's32[2]{0}', space=sflag, size = 0x8, scoped, tag = 'scoped memory for tpu_custom_call.1']
    #allocation8 [shape = 'u8[65536]{0}', space=vmem, size = 0x10000, scoped, tag = 'output window, operand 0']
    %8 = vsyncpa [#allocation4], 0
    %s9 = scalar_lea.sflag [#allocation4], 1
    %10 = vsyncpa %s9, 0
    %11 = vsyncpa [#allocation7], 0
    %s12 = scalar_lea.sflag [#allocation7], 1
    %13 = vsyncpa %s12, 0
    %14 = vsyncpa [#allocation5], 0
    %s15 = scalar_lea.sflag [#allocation5], 1
    %16 = vsyncpa %s15, 0
    loop: start=0, step=1, limit=6
    $region2: #{tpu_custom_call.1} parent=1 // loop_pre_header
      _
    $region3: #{tpu_custom_call.1} parent=1 // loop_header
      %s18 = sphi 0, %s22
      %p19 = scmp.ge.s32.totalorder %s18, 6
      %s25 = sphi 0, %s37
      %s26 = sphi 0, %s33
      %s27 = sphi 0, %s25
      %s28 = sphi 0, %s26
      %s29 = sphi 0, %s27
      %s30 = sphi 0, %s28
      %s42 = sphi 0, %s44
      %s45 = sphi 0, %s42
      %s46 = sphi 0, %s45
      %s62 = sphi 0, %s46
      %s68 = sphi 0, %s70
      %s71 = sphi 0, %s68
      %s72 = sphi 0, %s71
      %s88 = sphi 0, %s72
      %s92 = sphi 0, %s92
      %s94 = sphi 0, %s92
      %s95 = sphi 0, %s94
      %s109 = sphi 0, %s95
      %s115 = sphi 0, %s117
      %s118 = sphi 0, %s115
      %s119 = sphi 0, %s118
      %s135 = sphi 0, %s119
    $region4: #{tpu_custom_call.1} parent=1 // loop_header_branch
      %21 = sbr.rel (%p19) target = $region8
    $region5: #{tpu_custom_call.1} parent=1 // loop_body
      %s23 = ssub.s32 %s18, 1
      %s24 = ssub.s32 %s18, 2
      %s31 = sadd.s32 1, %s26
      %p32 = scmp.ge.s32.totalorder %s31, 2
      %s33 = scalar_select %p32, 0, %s31
      %s34 = sadd.s32 1, %s25
      %s35 = scalar_select %p32, %s34, %s25
      %p36 = scmp.ge.s32.totalorder %s35, 2
      %s37 = scalar_select %p36, 0, %s35
      %s38 = ssub.s32 %s25, %s37
      %s39 = ssub.s32 %s26, %s33
      %s40 = sor.u32 %s38, %s39
      %p41 = scmp.eq.s32.totalorder %s40, 0
      %s43 = sadd.s32 %s42, 1
      %s44 = scalar_select %p41, %s42, %s43
      %p47 = pneg %p41
      %p48 = scmp.eq.s32.totalorder %s18, 3
      %p49 = por %p47, %p48
      %p50 = scmp.ne.s32.totalorder %s42, %s45
      %p51 = scmp.eq.s32.totalorder %s18, 0
      %p52 = por %p50, %p51
      %p53 = scmp.ne.s32.totalorder %s42, %s45
      %p54 = scmp.eq.s32.totalorder %s23, 3
      %p55 = por %p53, %p54
      %p56 = scmp.ne.s32.totalorder %s45, %s46
      %p57 = scmp.eq.s32.totalorder %s23, 0
      %p58 = por %p56, %p57
      %p59 = scmp.ne.s32.totalorder %s45, %s46
      %p60 = scmp.eq.s32.totalorder %s24, 3
      %p61 = por %p59, %p60
      %p63 = scmp.ne.s32.totalorder %s46, %s62
      %p64 = scmp.eq.s32.totalorder %s24, 0
      %p65 = por %p63, %p64
      %s66 = ssub.s32 %s26, %s33
      %p67 = scmp.eq.s32.totalorder %s66, 0
      %s69 = sadd.s32 %s68, 1
      %s70 = scalar_select %p67, %s68, %s69
      %p73 = pneg %p67
      %p74 = scmp.eq.s32.totalorder %s18, 3
      %p75 = por %p73, %p74
      %p76 = scmp.ne.s32.totalorder %s68, %s71
      %p77 = scmp.eq.s32.totalorder %s18, 0
      %p78 = por %p76, %p77
      %p79 = scmp.ne.s32.totalorder %s68, %s71
      %p80 = scmp.eq.s32.totalorder %s23, 3
      %p81 = por %p79, %p80
      %p82 = scmp.ne.s32.totalorder %s71, %s72
      %p83 = scmp.eq.s32.totalorder %s23, 0
      %p84 = por %p82, %p83
      %p85 = scmp.ne.s32.totalorder %s71, %s72
      %p86 = scmp.eq.s32.totalorder %s24, 3
      %p87 = por %p85, %p86
      %p89 = scmp.ne.s32.totalorder %s72, %s88
      %p90 = scmp.eq.s32.totalorder %s24, 0
      %p91 = por %p89, %p90
      %s93 = sadd.s32 %s92, 1
      %p96 = scmp.eq.s32.totalorder %s18, 3
      %p97 = scmp.ne.s32.totalorder %s92, %s94
      %p98 = scmp.eq.s32.totalorder %s18, 0
      %p99 = por %p97, %p98
      %p100 = scmp.ne.s32.totalorder %s92, %s94
      %p101 = scmp.eq.s32.totalorder %s23, 3
      %p102 = por %p100, %p101
      %p103 = scmp.ne.s32.totalorder %s94, %s95
      %p104 = scmp.eq.s32.totalorder %s23, 0
      %p105 = por %p103, %p104
      %p106 = scmp.ne.s32.totalorder %s94, %s95
      %p107 = scmp.eq.s32.totalorder %s24, 3
      %p108 = por %p106, %p107
      %p110 = scmp.ne.s32.totalorder %s95, %s109
      %p111 = scmp.eq.s32.totalorder %s24, 0
      %p112 = por %p110, %p111
      %s113 = ssub.s32 %s25, %s37
      %p114 = scmp.eq.s32.totalorder %s113, 0
      %s116 = sadd.s32 %s115, 1
      %s117 = scalar_select %p114, %s115, %s116
      %p120 = pneg %p114
      %p121 = scmp.eq.s32.totalorder %s18, 3
      %p122 = por %p120, %p121
      %p123 = scmp.ne.s32.totalorder %s115, %s118
      %p124 = scmp.eq.s32.totalorder %s18, 0
      %p125 = por %p123, %p124
      %p126 = scmp.ne.s32.totalorder %s115, %s118
      %p127 = scmp.eq.s32.totalorder %s23, 3
      %p128 = por %p126, %p127
      %p129 = scmp.ne.s32.totalorder %s118, %s119
      %p130 = scmp.eq.s32.totalorder %s23, 0
      %p131 = por %p129, %p130
      %p132 = scmp.ne.s32.totalorder %s118, %s119
      %p133 = scmp.eq.s32.totalorder %s24, 3
      %p134 = por %p132, %p133
      %p136 = scmp.ne.s32.totalorder %s119, %s135
      %p137 = scmp.eq.s32.totalorder %s24, 0
      %p138 = por %p136, %p137
      %p139 = scmp.le.s32.totalorder 1, %s18
      %p140 = scmp.lt.s32.totalorder %s18, 5
      %p141 = pnand %p139, %p140
      %p142 = pneg %p141
      // Predicated region
      $region9: #{tpu_custom_call.1} parent=5 // pred_check
        _
      $region10: #{tpu_custom_call.1} parent=5 // pred_check_branch
        %144 = sbr.rel (%p141) target = $region12
      $region11: #{tpu_custom_call.1} parent=5 // pred_region
        %s145 = ssub.s32 %s18, 1
        // Predicated region
        $region13: #{tpu_custom_call.1} parent=11 // pred_check
          %p146 = pneg %p105
        $region14: #{tpu_custom_call.1} parent=11 // pred_check_branch
          %148 = sbr.rel (%p146) target = $region16
        $region15: #{tpu_custom_call.1} parent=11 // pred_region
          _
        $region16: #{tpu_custom_call.1} parent=11 // pred_fallthru
          _
      $region12: #{tpu_custom_call.1} parent=5 // pred_fallthru
        _
      %p149 = scmp.lt.s32.totalorder %s18, 4
      // Predicated region
      $region17: #{tpu_custom_call.1} parent=5 // pred_check
        %p150 = pneg %p149
      $region18: #{tpu_custom_call.1} parent=5 // pred_check_branch
        %152 = sbr.rel (%p150) target = $region20
      $region19: #{tpu_custom_call.1} parent=5 // pred_region
        // Predicated region
        $region21: #{tpu_custom_call.1} parent=19 // pred_check
          %p153 = pneg %p52
        $region22: #{tpu_custom_call.1} parent=19 // pred_check_branch
          %155 = sbr.rel (%p153) target = $region24
        $region23: #{tpu_custom_call.1} parent=19 // pred_region
          %s156 = sand.u32 %s42, 1
          %s157 = scalar_lea.sflag [#allocation4], %s156
          %s158 = sand.u32 %s42, 1
          %s159 = smul.addr %s158, 128
          %s160 = scalar_lea.vmem [#allocation3], %s159
          %s161 = smul.u32 16, %s25
          %s162 = smul.u32 2, %s26
          %s164 = ssub.s32 2048, 2048
          %165 = vsyncadd %s157, %s164
          %s166 = smul.addr %s161, 4
          %s167 = sadd.s32 %s162, %s166
          %s168 = smul.addr %s167, 64
          %s169 = scalar_lea.hbm %s0, %s168
          %s170 = sshll.u32 %s160, 4
          %s171 = int_to_ptr.vmem [resolvable:$true] %s170
          %176 = dma.hbm_to_vmem [thread:$0]  %s169, 2048, %s171, %s157, 256, 128, 8
        $region24: #{tpu_custom_call.1} parent=19 // pred_fallthru
          _
        // Predicated region
        $region25: #{tpu_custom_call.1} parent=19 // pred_check
          %p177 = pneg %p78
        $region26: #{tpu_custom_call.1} parent=19 // pred_check_branch
          %179 = sbr.rel (%p177) target = $region28
        $region27: #{tpu_custom_call.1} parent=19 // pred_region
          %s180 = sand.u32 %s68, 1
          %s181 = scalar_lea.sflag [#allocation7], %s180
          %s182 = sand.u32 %s68, 1
          %s183 = smul.addr %s182, 128
          %s184 = scalar_lea.vmem [#allocation6], %s183
          %s185 = smul.u32 32, %s26
          %s187 = ssub.s32 2048, 2048
          %188 = vsyncadd %s181, %s187
          %s189 = smul.addr %s185, 64
          %s190 = scalar_lea.hbm %s1, %s189
          %s191 = sshll.u32 %s184, 4
          %s192 = int_to_ptr.vmem [resolvable:$true] %s191
          %197 = dma.hbm_to_vmem [thread:$0]  %s190, 2048, %s192, %s181, 64, 64, 4
        $region28: #{tpu_custom_call.1} parent=19 // pred_fallthru
          _
      $region20: #{tpu_custom_call.1} parent=5 // pred_fallthru
        _
      %p198 = scmp.le.s32.totalorder 1, %s18
      %p199 = scmp.lt.s32.totalorder %s18, 5
      %p200 = pnand %p198, %p199
      %p201 = pneg %p200
      // Predicated region
      $region29: #{tpu_custom_call.1} parent=5 // pred_check
        _
      $region30: #{tpu_custom_call.1} parent=5 // pred_check_branch
        %203 = sbr.rel (%p200) target = $region32
      $region31: #{tpu_custom_call.1} parent=5 // pred_region
        %s204 = ssub.s32 %s18, 1
        %s205 = sand.u32 %s45, 1
        %s206 = scalar_lea.sflag [#allocation4], %s205
        %s207 = sand.u32 %s45, 1
        %s208 = smul.addr %s207, 128
        %s209 = scalar_lea.vmem [#allocation3], %s208
        // Predicated region
        $region33: #{tpu_custom_call.1} parent=31 // pred_check
          %p210 = pneg %p58
        $region34: #{tpu_custom_call.1} parent=31 // pred_check_branch
          %212 = sbr.rel (%p210) target = $region36
        $region35: #{tpu_custom_call.1} parent=31 // pred_region
          %213 = dma.done %s206, 2048
        $region36: #{tpu_custom_call.1} parent=31 // pred_fallthru
          _
        %s214 = sand.u32 %s71, 1
        %s215 = scalar_lea.sflag [#allocation7], %s214
        %s216 = sand.u32 %s71, 1
        %s217 = smul.addr %s216, 128
        %s218 = scalar_lea.vmem [#allocation6], %s217
        // Predicated region
        $region37: #{tpu_custom_call.1} parent=31 // pred_check
          %p219 = pneg %p84
        $region38: #{tpu_custom_call.1} parent=31 // pred_check_branch
          %221 = sbr.rel (%p219) target = $region40
        $region39: #{tpu_custom_call.1} parent=31 // pred_region
          %222 = dma.done %s215, 2048
        $region40: #{tpu_custom_call.1} parent=31 // pred_fallthru
          _
        %s223 = sand.u32 %s45, 1
        %s224 = scalar_lea.sflag [#allocation4], %s223
        %s225 = sand.u32 %s45, 1
        %s226 = smul.addr %s225, 128
        %s227 = scalar_lea.vmem [#allocation3], %s226
        %p228 = pneg %p58
        %p229 = pneg %p55
        %s230 = sand.u32 %s71, 1
        %s231 = scalar_lea.sflag [#allocation7], %s230
        %s232 = sand.u32 %s71, 1
        %s233 = smul.addr %s232, 128
        %s234 = scalar_lea.vmem [#allocation6], %s233
        %p235 = pneg %p84
        %p236 = pneg %p81
        %p237 = pneg %p105
        %p238 = pneg %p102
        %p239 = pneg %p131
        %p240 = pneg %p128
        %s241 = sand.u32 %s118, 1
        %s242 = scalar_lea.sflag [#allocation5], %s241
        %s243 = sand.u32 %s118, 1
        %s244 = smul.addr %s243, 64
        %s245 = scalar_lea.vmem [#allocation8], %s244
        %s246 = smul.u32 16, %s27
        %s247 = smul.u32 2, %s28
        %s248 = smul.u32 32, %s28
        %s249 = smul.u32 16, %s27
        %p251 = scmp.eq.s32.totalorder %s28, 0
        // Predicated region
        $region41: #{tpu_custom_call.1} parent=31 // pred_check
          %p252 = pneg %p251
        $region42: #{tpu_custom_call.1} parent=31 // pred_check_branch
          %254 = sbr.rel (%p252) target = $region44
        $region43: #{tpu_custom_call.1} parent=31 // pred_region
          %255 = vst [vmem:[#allocation2] sm:$0xff] 0.0
          %256 = vst [vmem:[#allocation2 + $0x8] sm:$0xff] 0.0
          %257 = vst [vmem:[#allocation2 + $0x10] sm:$0xff] 0.0
          %258 = vst [vmem:[#allocation2 + $0x18] sm:$0xff] 0.0
          %259 = vst [vmem:[#allocation2 + $0x20] sm:$0xff] 0.0
          %260 = vst [vmem:[#allocation2 + $0x28] sm:$0xff] 0.0
          %261 = vst [vmem:[#allocation2 + $0x30] sm:$0xff] 0.0
          %262 = vst [vmem:[#allocation2 + $0x38] sm:$0xff] 0.0
          %263 = vst [vmem:[#allocation2 + $0x40] sm:$0xff] 0.0
          %264 = vst [vmem:[#allocation2 + $0x48] sm:$0xff] 0.0
          %265 = vst [vmem:[#allocation2 + $0x50] sm:$0xff] 0.0
          %266 = vst [vmem:[#allocation2 + $0x58] sm:$0xff] 0.0
          %267 = vst [vmem:[#allocation2 + $0x60] sm:$0xff] 0.0
          %268 = vst [vmem:[#allocation2 + $0x68] sm:$0xff] 0.0
          %269 = vst [vmem:[#allocation2 + $0x70] sm:$0xff] 0.0
          %270 = vst [vmem:[#allocation2 + $0x78] sm:$0xff] 0.0
        $region44: #{tpu_custom_call.1} parent=31 // pred_fallthru
          _
        %v271 = vld [vmem:[#allocation2] sm:$0xff]
        %v272 = vld [vmem:[#allocation2 + $0x8] sm:$0xff]
        %v273 = vld [vmem:[#allocation2 + $0x10] sm:$0xff]
        %v274 = vld [vmem:[#allocation2 + $0x18] sm:$0xff]
        %v275 = vld [vmem:[#allocation2 + $0x20] sm:$0xff]
        %v276 = vld [vmem:[#allocation2 + $0x28] sm:$0xff]
        %v277 = vld [vmem:[#allocation2 + $0x30] sm:$0xff]
        %v278 = vld [vmem:[#allocation2 + $0x38] sm:$0xff]
        %v279 = vld [vmem:[#allocation2 + $0x40] sm:$0xff]
        %v280 = vld [vmem:[#allocation2 + $0x48] sm:$0xff]
        %v281 = vld [vmem:[#allocation2 + $0x50] sm:$0xff]
        %v282 = vld [vmem:[#allocation2 + $0x58] sm:$0xff]
        %v283 = vld [vmem:[#allocation2 + $0x60] sm:$0xff]
        %v284 = vld [vmem:[#allocation2 + $0x68] sm:$0xff]
        %v285 = vld [vmem:[#allocation2 + $0x70] sm:$0xff]
        %v286 = vld [vmem:[#allocation2 + $0x78] sm:$0xff]
        %v287 = vld [vmem:[%s209] sm:$0xff]
        %v288 = vld [vmem:[%s209 + $0x8] sm:$0xff]
        %v289 = vld [vmem:[%s209 + $0x10] sm:$0xff]
        %v290 = vld [vmem:[%s209 + $0x18] sm:$0xff]
        %v291 = vld [vmem:[%s209 + $0x20] sm:$0xff]
        %v292 = vld [vmem:[%s209 + $0x28] sm:$0xff]
        %v293 = vld [vmem:[%s209 + $0x30] sm:$0xff]
        %v294 = vld [vmem:[%s209 + $0x38] sm:$0xff]
        %v295 = vld [vmem:[%s209 + $0x40] sm:$0xff]
        %v296 = vld [vmem:[%s209 + $0x48] sm:$0xff]
        %v297 = vld [vmem:[%s209 + $0x50] sm:$0xff]
        %v298 = vld [vmem:[%s209 + $0x58] sm:$0xff]
        %v299 = vld [vmem:[%s209 + $0x60] sm:$0xff]
        %v300 = vld [vmem:[%s209 + $0x68] sm:$0xff]
        %v301 = vld [vmem:[%s209 + $0x70] sm:$0xff]
        %v302 = vld [vmem:[%s209 + $0x78] sm:$0xff]
        %v303 = vld [vmem:[%s218] sm:$0xf]
        %v304 = vld [vmem:[%s218 + $0x4] sm:$0xf]
        %v305 = vld [vmem:[%s218 + $0x8] sm:$0xf]
        %v306 = vld [vmem:[%s218 + $0xc] sm:$0xf]
        %v307 = vld [vmem:[%s218 + $0x10] sm:$0xf]
        %v308 = vld [vmem:[%s218 + $0x14] sm:$0xf]
        %v309 = vld [vmem:[%s218 + $0x18] sm:$0xf]
        %v310 = vld [vmem:[%s218 + $0x1c] sm:$0xf]
        %v311 = vld [vmem:[%s218 + $0x20] sm:$0xf]
        %v312 = vld [vmem:[%s218 + $0x24] sm:$0xf]
        %v313 = vld [vmem:[%s218 + $0x28] sm:$0xf]
        %v314 = vld [vmem:[%s218 + $0x2c] sm:$0xf]
        %v315 = vld [vmem:[%s218 + $0x30] sm:$0xf]
        %v316 = vld [vmem:[%s218 + $0x34] sm:$0xf]
        %v317 = vld [vmem:[%s218 + $0x38] sm:$0xf]
        %v318 = vld [vmem:[%s218 + $0x3c] sm:$0xf]
        %v319 = vld [vmem:[%s218 + $0x40] sm:$0xf]
        %v320 = vld [vmem:[%s218 + $0x44] sm:$0xf]
        %v321 = vld [vmem:[%s218 + $0x48] sm:$0xf]
        %v322 = vld [vmem:[%s218 + $0x4c] sm:$0xf]
        %v323 = vld [vmem:[%s218 + $0x50] sm:$0xf]
        %v324 = vld [vmem:[%s218 + $0x54] sm:$0xf]
        %v325 = vld [vmem:[%s218 + $0x58] sm:$0xf]
        %v326 = vld [vmem:[%s218 + $0x5c] sm:$0xf]
        %v327 = vld [vmem:[%s218 + $0x60] sm:$0xf]
        %v328 = vld [vmem:[%s218 + $0x64] sm:$0xf]
        %v329 = vld [vmem:[%s218 + $0x68] sm:$0xf]
        %v330 = vld [vmem:[%s218 + $0x6c] sm:$0xf]
        %v331 = vld [vmem:[%s218 + $0x70] sm:$0xf]
        %v332 = vld [vmem:[%s218 + $0x74] sm:$0xf]
        %v333 = vld [vmem:[%s218 + $0x78] sm:$0xf]
        %v334 = vld [vmem:[%s218 + $0x7c] sm:$0xf]
        %v351 = vunpack.c.l.b16 %v287
        %v352 = vunpack.c.h.b16 %v287
        %v353 = vunpack.c.l.b16 %v288
        %v354 = vunpack.c.h.b16 %v288
        %v355 = vunpack.c.l.b16 %v289
        %v356 = vunpack.c.h.b16 %v289
        %v357 = vunpack.c.l.b16 %v290
        %v358 = vunpack.c.h.b16 %v290
        %v359 = vunpack.c.l.b16 %v291
        %v360 = vunpack.c.h.b16 %v291
        %v361 = vunpack.c.l.b16 %v292
        %v362 = vunpack.c.h.b16 %v292
        %v363 = vunpack.c.l.b16 %v293
        %v364 = vunpack.c.h.b16 %v293
        %v365 = vunpack.c.l.b16 %v294
        %v366 = vunpack.c.h.b16 %v294
        %v367 = vunpack.c.l.b16 %v295
        %v368 = vunpack.c.h.b16 %v295
        %v369 = vunpack.c.l.b16 %v296
        %v370 = vunpack.c.h.b16 %v296
        %v371 = vunpack.c.l.b16 %v297
        %v372 = vunpack.c.h.b16 %v297
        %v373 = vunpack.c.l.b16 %v298
        %v374 = vunpack.c.h.b16 %v298
        %v375 = vunpack.c.l.b16 %v299
        %v376 = vunpack.c.h.b16 %v299
        %v377 = vunpack.c.l.b16 %v300
        %v378 = vunpack.c.h.b16 %v300
        %v379 = vunpack.c.l.b16 %v301
        %v380 = vunpack.c.h.b16 %v301
        %v381 = vunpack.c.l.b16 %v302
        %v382 = vunpack.c.h.b16 %v302
        %v383 = vpack.c.b16 %v353, %v351
        %v384 = vpack.c.b16 %v354, %v352
        %v385 = vpack.c.b16 %v357, %v355
        %v386 = vpack.c.b16 %v358, %v356
        %v387 = vpack.c.b16 %v361, %v359
        %v388 = vpack.c.b16 %v362, %v360
        %v389 = vpack.c.b16 %v365, %v363
        %v390 = vpack.c.b16 %v366, %v364
        %v391 = vpack.c.b16 %v369, %v367
        %v392 = vpack.c.b16 %v370, %v368
        %v393 = vpack.c.b16 %v373, %v371
        %v394 = vpack.c.b16 %v374, %v372
        %v395 = vpack.c.b16 %v377, %v375
        %v396 = vpack.c.b16 %v378, %v376
        %v397 = vpack.c.b16 %v381, %v379
        %v398 = vpack.c.b16 %v382, %v380
        %v447 = vunpack.c.l.b16 %v303
        %v448 = vunpack.c.l.b16 %v304
        %v449 = vunpack.c.l.b16 %v305
        %v450 = vunpack.c.l.b16 %v306
        %v451 = vunpack.c.l.b16 %v307
        %v452 = vunpack.c.l.b16 %v308
        %v453 = vunpack.c.l.b16 %v309
        %v454 = vunpack.c.l.b16 %v310
        %v455 = vunpack.c.l.b16 %v311
        %v456 = vunpack.c.l.b16 %v312
        %v457 = vunpack.c.l.b16 %v313
        %v458 = vunpack.c.l.b16 %v314
        %v459 = vunpack.c.l.b16 %v315
        %v460 = vunpack.c.l.b16 %v316
        %v461 = vunpack.c.l.b16 %v317
        %v462 = vunpack.c.l.b16 %v318
        %v463 = vunpack.c.l.b16 %v319
        %v464 = vunpack.c.l.b16 %v320
        %v465 = vunpack.c.l.b16 %v321
        %v466 = vunpack.c.l.b16 %v322
        %v467 = vunpack.c.l.b16 %v323
        %v468 = vunpack.c.l.b16 %v324
        %v469 = vunpack.c.l.b16 %v325
        %v470 = vunpack.c.l.b16 %v326
        %v471 = vunpack.c.l.b16 %v327
        %v472 = vunpack.c.l.b16 %v328
        %v473 = vunpack.c.l.b16 %v329
        %v474 = vunpack.c.l.b16 %v330
        %v475 = vunpack.c.l.b16 %v331
        %v476 = vunpack.c.l.b16 %v332
        %v477 = vunpack.c.l.b16 %v333
        %v478 = vunpack.c.l.b16 %v334
        %v479 = vpack.c.b16 %v448, %v447
        %v480 = vpack.c.b16 %v450, %v449
        %v481 = vpack.c.b16 %v452, %v451
        %v482 = vpack.c.b16 %v454, %v453
        %v483 = vpack.c.b16 %v456, %v455
        %v484 = vpack.c.b16 %v458, %v457
        %v485 = vpack.c.b16 %v460, %v459
        %v486 = vpack.c.b16 %v462, %v461
        %v487 = vpack.c.b16 %v464, %v463
        %v488 = vpack.c.b16 %v466, %v465
        %v489 = vpack.c.b16 %v468, %v467
        %v490 = vpack.c.b16 %v470, %v469
        %v491 = vpack.c.b16 %v472, %v471
        %v492 = vpack.c.b16 %v474, %v473
        %v493 = vpack.c.b16 %v476, %v475
        %v494 = vpack.c.b16 %v478, %v477
        %511 = vmatprep.subr.bf16.mxu0 0
        %512 = vmatpush1.bf16.msra.mxu0 %v479
        %513 = vmatprep.subr.bf16.mxu0 0
        %514 = vmatpush1.bf16.msra.mxu0 %v480
        %515 = vmatprep.subr.bf16.mxu0 0
        %516 = vmatpush1.bf16.msra.mxu0 %v481
        %517 = vmatprep.subr.bf16.mxu0 0
        %518 = vmatpush1.bf16.msra.mxu0 %v482
        %519 = vmatprep.subr.bf16.mxu0 0
        %520 = vmatpush1.bf16.msra.mxu0 %v483
        %521 = vmatprep.subr.bf16.mxu0 0
        %522 = vmatpush1.bf16.msra.mxu0 %v484
        %523 = vmatprep.subr.bf16.mxu0 0
        %524 = vmatpush1.bf16.msra.mxu0 %v485
        %525 = vmatprep.subr.bf16.mxu0 0
        %526 = vmatpush1.bf16.msra.mxu0 %v486
        %527 = vmatprep.subr.bf16.mxu0 0
        %528 = vmatpush1.bf16.msra.mxu0 %v487
        %529 = vmatprep.subr.bf16.mxu0 0
        %530 = vmatpush1.bf16.msra.mxu0 %v488
        %531 = vmatprep.subr.bf16.mxu0 0
        %532 = vmatpush1.bf16.msra.mxu0 %v489
        %533 = vmatprep.subr.bf16.mxu0 0
        %534 = vmatpush1.bf16.msra.mxu0 %v490
        %535 = vmatprep.subr.bf16.mxu0 0
        %536 = vmatpush1.bf16.msra.mxu0 %v491
        %537 = vmatprep.subr.bf16.mxu0 0
        %538 = vmatpush1.bf16.msra.mxu0 %v492
        %539 = vmatprep.subr.bf16.mxu0 0
        %540 = vmatpush1.bf16.msra.mxu0 %v493
        %541 = vmatprep.subr.bf16.mxu0 0
        %542 = vmatpush1.bf16.msra.mxu0 %v494
        %543 = vmatprep.mubr.bf16.mxu0 %v384
        %544 = vmatmul.mubr.bf16.gmra.mrb[0].mxu0 %v383
        %v545 = vpop.f32.mrb[0].mxu0
        %v546 = vadd.f32 0.0, %v545
        %v547 = vpop.f32.mrb[0].mxu0
        %v548 = vpop.f32.mrb[0].mxu0
        %v549 = vadd.f32 0.0, %v548
        %v550 = vpop.f32.mrb[0].mxu0
        %551 = vmatprep.mubr.bf16.mxu0 %v386
        %552 = vmatmul.mubr.bf16.gmra.mrb[0].mxu0 %v385
        %v553 = vpop.f32.mrb[0].mxu0
        %v554 = vadd.f32 0.0, %v553
        %v555 = vpop.f32.mrb[0].mxu0
        %v556 = vpop.f32.mrb[0].mxu0
        %v557 = vadd.f32 0.0, %v556
        %v558 = vpop.f32.mrb[0].mxu0
        %559 = vmatprep.mubr.bf16.mxu0 %v388
        %560 = vmatmul.mubr.bf16.gmra.mrb[0].mxu0 %v387
        %v561 = vpop.f32.mrb[0].mxu0
        %v562 = vadd.f32 0.0, %v561
        %v563 = vpop.f32.mrb[0].mxu0
        %v564 = vpop.f32.mrb[0].mxu0
        %v565 = vadd.f32 0.0, %v564
        %v566 = vpop.f32.mrb[0].mxu0
        %567 = vmatprep.mubr.bf16.mxu0 %v390
        %568 = vmatmul.mubr.bf16.gmra.mrb[0].mxu0 %v389
        %v569 = vpop.f32.mrb[0].mxu0
        %v570 = vadd.f32 0.0, %v569
        %v571 = vpop.f32.mrb[0].mxu0
        %v572 = vpop.f32.mrb[0].mxu0
        %v573 = vadd.f32 0.0, %v572
        %v574 = vpop.f32.mrb[0].mxu0
        %575 = vmatprep.mubr.bf16.mxu0 %v392
        %576 = vmatmul.mubr.bf16.gmra.mrb[0].mxu0 %v391
        %v577 = vpop.f32.mrb[0].mxu0
        %v578 = vadd.f32 0.0, %v577
        %v579 = vpop.f32.mrb[0].mxu0
        %v580 = vpop.f32.mrb[0].mxu0
        %v581 = vadd.f32 0.0, %v580
        %v582 = vpop.f32.mrb[0].mxu0
        %583 = vmatprep.mubr.bf16.mxu0 %v394
        %584 = vmatmul.mubr.bf16.gmra.mrb[0].mxu0 %v393
        %v585 = vpop.f32.mrb[0].mxu0
        %v586 = vadd.f32 0.0, %v585
        %v587 = vpop.f32.mrb[0].mxu0
        %v588 = vpop.f32.mrb[0].mxu0
        %v589 = vadd.f32 0.0, %v588
        %v590 = vpop.f32.mrb[0].mxu0
        %591 = vmatprep.mubr.bf16.mxu0 %v396
        %592 = vmatmul.mubr.bf16.gmra.mrb[0].mxu0 %v395
        %v593 = vpop.f32.mrb[0].mxu0
        %v594 = vadd.f32 0.0, %v593
        %v595 = vpop.f32.mrb[0].mxu0
        %v596 = vpop.f32.mrb[0].mxu0
        %v597 = vadd.f32 0.0, %v596
        %v598 = vpop.f32.mrb[0].mxu0
        %599 = vmatprep.mubr.bf16.mxu0 %v398
        %600 = vmatmul.mubr.bf16.gmra.mrb[0].mxu0 %v397
        %v601 = vpop.f32.mrb[0].mxu0
        %v602 = vadd.f32 0.0, %v601
        %v603 = vpop.f32.mrb[0].mxu0
        %v604 = vpop.f32.mrb[0].mxu0
        %v605 = vadd.f32 0.0, %v604
        %v606 = vpop.f32.mrb[0].mxu0
        %607 = vdwg.mxu0
        %v608 = vadd.f32 %v271, %v546
        %v609 = vadd.f32 %v272, %v549
        %v610 = vadd.f32 %v273, %v554
        %v611 = vadd.f32 %v274, %v557
        %v612 = vadd.f32 %v275, %v562
        %v613 = vadd.f32 %v276, %v565
        %v614 = vadd.f32 %v277, %v570
        %v615 = vadd.f32 %v278, %v573
        %v616 = vadd.f32 %v279, %v578
        %v617 = vadd.f32 %v280, %v581
        %v618 = vadd.f32 %v281, %v586
        %v619 = vadd.f32 %v282, %v589
        %v620 = vadd.f32 %v283, %v594
        %v621 = vadd.f32 %v284, %v597
        %v622 = vadd.f32 %v285, %v602
        %v623 = vadd.f32 %v286, %v605
        %624 = vst [vmem:[#allocation2] sm:$0xff] %v608
        %625 = vst [vmem:[#allocation2 + $0x8] sm:$0xff] %v609
        %626 = vst [vmem:[#allocation2 + $0x10] sm:$0xff] %v610
        %627 = vst [vmem:[#allocation2 + $0x18] sm:$0xff] %v611
        %628 = vst [vmem:[#allocation2 + $0x20] sm:$0xff] %v612
        %629 = vst [vmem:[#allocation2 + $0x28] sm:$0xff] %v613
        %630 = vst [vmem:[#allocation2 + $0x30] sm:$0xff] %v614
        %631 = vst [vmem:[#allocation2 + $0x38] sm:$0xff] %v615
        %632 = vst [vmem:[#allocation2 + $0x40] sm:$0xff] %v616
        %633 = vst [vmem:[#allocation2 + $0x48] sm:$0xff] %v617
        %634 = vst [vmem:[#allocation2 + $0x50] sm:$0xff] %v618
        %635 = vst [vmem:[#allocation2 + $0x58] sm:$0xff] %v619
        %636 = vst [vmem:[#allocation2 + $0x60] sm:$0xff] %v620
        %637 = vst [vmem:[#allocation2 + $0x68] sm:$0xff] %v621
        %638 = vst [vmem:[#allocation2 + $0x70] sm:$0xff] %v622
        %639 = vst [vmem:[#allocation2 + $0x78] sm:$0xff] %v623
        %p640 = scmp.eq.s32.totalorder %s28, 1
        // Predicated region
        $region45: #{tpu_custom_call.1} parent=31 // pred_check
          %p641 = pneg %p640
        $region46: #{tpu_custom_call.1} parent=31 // pred_check_branch
          %643 = sbr.rel (%p641) target = $region48
        $region47: #{tpu_custom_call.1} parent=31 // pred_region
          %v644 = vld [vmem:[#allocation2] sm:$0xff]
          %v645 = vld [vmem:[#allocation2 + $0x8] sm:$0xff]
          %v646 = vld [vmem:[#allocation2 + $0x10] sm:$0xff]
          %v647 = vld [vmem:[#allocation2 + $0x18] sm:$0xff]
          %v648 = vld [vmem:[#allocation2 + $0x20] sm:$0xff]
          %v649 = vld [vmem:[#allocation2 + $0x28] sm:$0xff]
          %v650 = vld [vmem:[#allocation2 + $0x30] sm:$0xff]
          %v651 = vld [vmem:[#allocation2 + $0x38] sm:$0xff]
          %v652 = vld [vmem:[#allocation2 + $0x40] sm:$0xff]
          %v653 = vld [vmem:[#allocation2 + $0x48] sm:$0xff]
          %v654 = vld [vmem:[#allocation2 + $0x50] sm:$0xff]
          %v655 = vld [vmem:[#allocation2 + $0x58] sm:$0xff]
          %v656 = vld [vmem:[#allocation2 + $0x60] sm:$0xff]
          %v657 = vld [vmem:[#allocation2 + $0x68] sm:$0xff]
          %v658 = vld [vmem:[#allocation2 + $0x70] sm:$0xff]
          %v659 = vld [vmem:[#allocation2 + $0x78] sm:$0xff]
          %v660 = vld [vmem:[%s2] sm:$0x1]
          %v662 = vlaneseq
          %v663 = vshrl.u32 %v662, 7
          %v664 = vsub.s32 0, %v663
          %v665 = vrot.slane %v660, %v664
          %v667 = vadd.f32 %v644, %v665
          %v668 = vadd.f32 %v645, %v665
          %v669 = vadd.f32 %v646, %v665
          %v670 = vadd.f32 %v647, %v665
          %v671 = vadd.f32 %v648, %v665
          %v672 = vadd.f32 %v649, %v665
          %v673 = vadd.f32 %v650, %v665
          %v674 = vadd.f32 %v651, %v665
          %v675 = vadd.f32 %v652, %v665
          %v676 = vadd.f32 %v653, %v665
          %v677 = vadd.f32 %v654, %v665
          %v678 = vadd.f32 %v655, %v665
          %v679 = vadd.f32 %v656, %v665
          %v680 = vadd.f32 %v657, %v665
          %v681 = vadd.f32 %v658, %v665
          %v682 = vadd.f32 %v659, %v665
          %v683 = vpack.c.bf16 %v668, %v667
          %v684 = vpack.c.bf16 %v670, %v669
          %v685 = vpack.c.bf16 %v672, %v671
          %v686 = vpack.c.bf16 %v674, %v673
          %v687 = vpack.c.bf16 %v676, %v675
          %v688 = vpack.c.bf16 %v678, %v677
          %v689 = vpack.c.bf16 %v680, %v679
          %v690 = vpack.c.bf16 %v682, %v681
          %v699 = vunpack.c.l.b16 %v683
          %v700 = vunpack.c.h.b16 %v683
          %v701 = vunpack.c.l.b16 %v684
          %v702 = vunpack.c.h.b16 %v684
          %v703 = vunpack.c.l.b16 %v685
          %v704 = vunpack.c.h.b16 %v685
          %v705 = vunpack.c.l.b16 %v686
          %v706 = vunpack.c.h.b16 %v686
          %v707 = vunpack.c.l.b16 %v687
          %v708 = vunpack.c.h.b16 %v687
          %v709 = vunpack.c.l.b16 %v688
          %v710 = vunpack.c.h.b16 %v688
          %v711 = vunpack.c.l.b16 %v689
          %v712 = vunpack.c.h.b16 %v689
          %v713 = vunpack.c.l.b16 %v690
          %v714 = vunpack.c.h.b16 %v690
          %v715 = vpack.c.b16 %v699, %v699
          %v716 = vpack.c.b16 %v700, %v700
          %v717 = vpack.c.b16 %v701, %v701
          %v718 = vpack.c.b16 %v702, %v702
          %v719 = vpack.c.b16 %v703, %v703
          %v720 = vpack.c.b16 %v704, %v704
          %v721 = vpack.c.b16 %v705, %v705
          %v722 = vpack.c.b16 %v706, %v706
          %v723 = vpack.c.b16 %v707, %v707
          %v724 = vpack.c.b16 %v708, %v708
          %v725 = vpack.c.b16 %v709, %v709
          %v726 = vpack.c.b16 %v710, %v710
          %v727 = vpack.c.b16 %v711, %v711
          %v728 = vpack.c.b16 %v712, %v712
          %v729 = vpack.c.b16 %v713, %v713
          %v730 = vpack.c.b16 %v714, %v714
          %747 = vst [vmem:[%s245] sm:$0xf] %v715
          %748 = vst [vmem:[%s245 + $0x4] sm:$0xf] %v716
          %749 = vst [vmem:[%s245 + $0x8] sm:$0xf] %v717
          %750 = vst [vmem:[%s245 + $0xc] sm:$0xf] %v718
          %751 = vst [vmem:[%s245 + $0x10] sm:$0xf] %v719
          %752 = vst [vmem:[%s245 + $0x14] sm:$0xf] %v720
          %753 = vst [vmem:[%s245 + $0x18] sm:$0xf] %v721
          %754 = vst [vmem:[%s245 + $0x1c] sm:$0xf] %v722
          %755 = vst [vmem:[%s245 + $0x20] sm:$0xf] %v723
          %756 = vst [vmem:[%s245 + $0x24] sm:$0xf] %v724
          %757 = vst [vmem:[%s245 + $0x28] sm:$0xf] %v725
          %758 = vst [vmem:[%s245 + $0x2c] sm:$0xf] %v726
          %759 = vst [vmem:[%s245 + $0x30] sm:$0xf] %v727
          %760 = vst [vmem:[%s245 + $0x34] sm:$0xf] %v728
          %761 = vst [vmem:[%s245 + $0x38] sm:$0xf] %v729
          %762 = vst [vmem:[%s245 + $0x3c] sm:$0xf] %v730
        $region48: #{tpu_custom_call.1} parent=31 // pred_fallthru
          _
        %s763 = sand.u32 %s118, 1
        %s764 = scalar_lea.sflag [#allocation5], %s763
        %s765 = sand.u32 %s118, 1
        %s766 = smul.addr %s765, 64
        %s767 = scalar_lea.vmem [#allocation8], %s766
        // Predicated region
        $region49: #{tpu_custom_call.1} parent=31 // pred_check
          %p768 = pneg %p128
        $region50: #{tpu_custom_call.1} parent=31 // pred_check_branch
          %770 = sbr.rel (%p768) target = $region52
        $region51: #{tpu_custom_call.1} parent=31 // pred_region
          %s771 = smul.u32 16, %s27
          %s773 = ssub.s32 1024, 1024
          %774 = vsyncadd %s764, %s773
          %s775 = smul.addr %s771, 64
          %s776 = scalar_lea.hbm %s3, %s775
          %s777 = sshll.u32 %s767, 4
          %s778 = int_to_ptr.vmem [resolvable:$true] %s777
          %783 = dma.vmem_to_hbm [thread:$0]  %s778, 1024, %s776, %s764, 64, 64, 4
        $region52: #{tpu_custom_call.1} parent=31 // pred_fallthru
          _
      $region32: #{tpu_custom_call.1} parent=5 // pred_fallthru
        _
      %p784 = scmp.le.s32.totalorder 2, %s18
      // Predicated region
      $region53: #{tpu_custom_call.1} parent=5 // pred_check
        %p785 = pneg %p784
      $region54: #{tpu_custom_call.1} parent=5 // pred_check_branch
        %787 = sbr.rel (%p785) target = $region56
      $region55: #{tpu_custom_call.1} parent=5 // pred_region
        %s788 = ssub.s32 %s18, 2
        // Predicated region
        $region57: #{tpu_custom_call.1} parent=55 // pred_check
          %p789 = pneg %p134
        $region58: #{tpu_custom_call.1} parent=55 // pred_check_branch
          %791 = sbr.rel (%p789) target = $region60
        $region59: #{tpu_custom_call.1} parent=55 // pred_region
          %s792 = sand.u32 %s119, 1
          %s793 = scalar_lea.sflag [#allocation5], %s792
          %s794 = sand.u32 %s119, 1
          %s795 = smul.addr %s794, 64
          %s796 = scalar_lea.vmem [#allocation8], %s795
          %797 = dma.done %s793, 1024
        $region60: #{tpu_custom_call.1} parent=55 // pred_fallthru
          _
      $region56: #{tpu_custom_call.1} parent=5 // pred_fallthru
        _
    $region6: #{tpu_custom_call.1} parent=1 // loop_footer
      %s22 = sadd.s32 1, %s18
    $region7: #{tpu_custom_call.1} parent=1 // loop_footer_branch
      %17 = sbr.rel target = $region3
    $region8: #{tpu_custom_call.1} parent=1 // loop_exit
      _
    %798 = vsyncpa [#allocation4], 1
    %s799 = scalar_lea.sflag [#allocation4], 1
    %800 = vsyncpa %s799, 1
    %801 = vsyncpa [#allocation7], 1
    %s802 = scalar_lea.sflag [#allocation7], 1
    %803 = vsyncpa %s802, 1
    %804 = vsyncpa [#allocation5], 1
    %s805 = scalar_lea.sflag [#allocation5], 1
    %806 = vsyncpa %s805, 1

</llo_original>
